<compile_context>
chip_gen: v5e
topology: v5e:2x2
jax: 0.10.0
libtpu: 0.0.40
codegen_flags: <defaults>
</compile_context>

<pallas_src>
import jax
import jax.numpy as jnp
from jax.experimental import pallas as pl
from jax.experimental.pallas import tpu as pltpu


_LANE = 512                # lane-dense last dim (multiple of 128)
_TARGET_BLOCK_ROWS = 2048  # (2048, 512) f32 block = 4 MiB per input
_NUM_OUTER = 2             # megacore split on v7x; no-op cost elsewhere


def _round_up(x, m):
    return ((x + m - 1) // m) * m


def _cdiv(a, b):
    return -(-a // b)


def _loss_kernel(pred_ref, tgt_ref, out_ref, acc_ref):
    j = pl.program_id(1)

    @pl.when(j == 0)
    def _():
        acc_ref[...] = jnp.zeros_like(acc_ref)

    p = pred_ref[...].astype(jnp.float32)
    t = tgt_ref[...].astype(jnp.float32)
    d = p - t
    val = (d * d) / (1.005 - t)
    # Keep the running sum vreg-shaped: (block_rows, LANE) -> (8, LANE) via
    # sublane-aligned grouping; only VPU adds per grid step, no cross-lane
    # reduce until the very end.
    acc_ref[...] += val.reshape(-1, 8, val.shape[-1]).sum(axis=0)

    @pl.when(j == pl.num_programs(1) - 1)
    def _():
        out_ref[0] = acc_ref[...]


def _nearest_resize_nchw(x, out_h, out_w):
    """PyTorch F.interpolate(mode='nearest') semantics: src = floor(dst*in/out)."""
    n, c, h, w = x.shape
    if out_h % h == 0 and out_w % w == 0:
        # Integer upsample ratio -> pure broadcast/reshape (no gather).
        rh, rw = out_h // h, out_w // w
        xb = jnp.broadcast_to(x[:, :, :, None, :, None], (n, c, h, rh, w, rw))
        return xb.reshape(n, c, out_h, out_w)
    rows = (jnp.arange(out_h) * h) // out_h
    cols = (jnp.arange(out_w) * w) // out_w
    return x[:, :, rows[:, None], cols[None, :]]


def pose_estimation_loss(heatmap_prediction, target):
    """target = (heatmap_target, presence_target, _) -- only heatmap_target used."""
    heatmap_target, _presence_target, _ = target
    n, c, h, w = heatmap_prediction.shape

    # Glue: nearest interpolation of the target to the prediction's size.
    # TODO(synk): fuse the nearest-neighbor expansion into the kernel to avoid
    # materializing the resized target in HBM (saves one full-size write+read).
    heatmap_target = _nearest_resize_nchw(heatmap_target, h, w)

    total = n * c * h * w

    # Lane-dense flattening with zero padding: padded elements contribute
    # (0-0)^2 / (1.005-0) == 0, so only the divisor (true count) must be exact.
    rows = _cdiv(total, _LANE)
    block_rows = min(_TARGET_BLOCK_ROWS, _round_up(_cdiv(rows, _NUM_OUTER), 8))
    grid_inner = _cdiv(rows, _NUM_OUTER * block_rows)
    padded_rows = _NUM_OUTER * grid_inner * block_rows
    padded_total = padded_rows * _LANE

    def _prep(x):
        # Keep the original dtype (no wrapper upcast); kernel casts to f32.
        flat = x.reshape(-1)
        flat = jnp.pad(flat, (0, padded_total - total))
        return flat.reshape(padded_rows, _LANE)

    pred2d = _prep(heatmap_prediction)
    tgt2d = _prep(heatmap_target)

    partials = pl.pallas_call(
        _loss_kernel,
        out_shape=jax.ShapeDtypeStruct((_NUM_OUTER, 8, _LANE), jnp.float32),
        grid_spec=pltpu.PrefetchScalarGridSpec(
            num_scalar_prefetch=0,
            grid=(_NUM_OUTER, grid_inner),
            in_specs=[
                pl.BlockSpec((block_rows, _LANE),
                             lambda i, j: (i * grid_inner + j, 0)),
                pl.BlockSpec((block_rows, _LANE),
                             lambda i, j: (i * grid_inner + j, 0)),
            ],
            out_specs=pl.BlockSpec((1, 8, _LANE), lambda i, j: (i, 0, 0)),
            scratch_shapes=[pltpu.VMEM((8, _LANE), jnp.float32)],
        ),
        compiler_params=pltpu.CompilerParams(
            dimension_semantics=("parallel", "arbitrary"),
            vmem_limit_bytes=32 * 1024 * 1024,
        ),
    )(pred2d, tgt2d)

    # Single tiny final reduce (2*8*512 partial sums) + mean normalization.
    return jnp.sum(partials) / jnp.float32(total)


def pose_estimation_loss_ref(heatmap_prediction, target):
    heatmap_target, _presence_target, _ = target
    _, _, h, w = heatmap_prediction.shape
    heatmap_target = _nearest_resize_nchw(heatmap_target, h, w)
    return jnp.mean(
        (heatmap_prediction - heatmap_target) ** 2 / (1.0 - heatmap_target + 0.005)
    )


if __name__ == "__main__":
    key = jax.random.PRNGKey(0)
    k1, k2, k3 = jax.random.split(key, 3)

    n, c = 2, 4
    pred_hw = 16
    tgt_hw = 8  # nearest interpolation upsamples 8x8 -> 16x16

    heatmap_prediction = jax.random.uniform(
        k1, (n, c, pred_hw, pred_hw), dtype=jnp.float32
    )
    heatmap_target = jax.random.uniform(
        k2, (n, c, tgt_hw, tgt_hw), dtype=jnp.float32, minval=0.0, maxval=0.9
    )
    presence_target = jax.random.uniform(k3, (n, c), dtype=jnp.float32)
    extra = jnp.zeros((n, c), dtype=jnp.float32)  # unused third target element

    target = (heatmap_target, presence_target, extra)

    loss = pose_estimation_loss(heatmap_prediction, target)
    jax.block_until_ready(loss)

    loss_ref = pose_estimation_loss_ref(heatmap_prediction, target)
    assert jnp.allclose(loss, loss_ref, rtol=1e-5, atol=1e-6), (loss, loss_ref)

    print("KERNEL_OK")
</pallas_src>

<mosaic_0001>
module attributes {stable_mosaic.version = 11 : i64} {
  func.func @_loss_kernel(%arg0: i32, %arg1: i32, %arg2: memref<8x512xf32, #tpu.memory_space<vmem>>, %arg3: memref<8x512xf32, #tpu.memory_space<vmem>>, %arg4: memref<1x8x512xf32, #tpu.memory_space<vmem>>, %arg5: memref<8x512xf32, #tpu.memory_space<vmem>>) attributes {dimension_semantics = [#tpu.dimension_semantics<parallel>, #tpu.dimension_semantics<arbitrary>], iteration_bounds = array<i64: 2, 1>, scalar_prefetch = 0 : i64, scratch_operands = 1 : i64, tpu.core_type = #tpu.core_type<tc>, window_params = [{transform_indices = @transform_0, window_bounds = array<i64: 8, 512>}, {transform_indices = @transform_1, window_bounds = array<i64: 8, 512>}, {transform_indices = @transform_2, window_bounds = array<i64: 1, 8, 512>}]} {
    %c0_i32 = arith.constant 0 : i32
    %0 = arith.cmpi eq, %arg1, %c0_i32 : i32
    %1 = arith.extui %0 : i1 to i32
    %c0_i32_0 = arith.constant 0 : i32
    %2 = arith.cmpi ne, %1, %c0_i32_0 : i32
    scf.if %2 {
      %cst_11 = arith.constant 0.000000e+00 : f32
      %18 = vector.broadcast %cst_11 : f32 to vector<8x512xf32>
      %c0_12 = arith.constant 0 : index
      %c0_13 = arith.constant 0 : index
      %19 = vector.load %arg5[%c0_12, %c0_13] : memref<8x512xf32, #tpu.memory_space<vmem>>, vector<8x512xf32>
      tpu.vector_store %arg5[%c0_12, %c0_13], %18 {strides = array<i32>} : memref<8x512xf32, #tpu.memory_space<vmem>>, vector<8x512xf32>,
    } else {
    }
    %c0 = arith.constant 0 : index
    %c0_1 = arith.constant 0 : index
    %3 = vector.load %arg2[%c0, %c0_1] : memref<8x512xf32, #tpu.memory_space<vmem>>, vector<8x512xf32>
    %c0_2 = arith.constant 0 : index
    %c0_3 = arith.constant 0 : index
    %4 = vector.load %arg3[%c0_2, %c0_3] : memref<8x512xf32, #tpu.memory_space<vmem>>, vector<8x512xf32>
    %5 = arith.subf %3, %4 : vector<8x512xf32>
    %6 = arith.mulf %5, %5 : vector<8x512xf32>
    %cst = arith.constant 1.005000e+00 : f32
    %7 = vector.broadcast %cst : f32 to vector<8x512xf32>
    %8 = arith.subf %7, %4 : vector<8x512xf32>
    %9 = arith.divf %6, %8 : vector<8x512xf32>
    %c0_4 = arith.constant 0 : index
    %c0_5 = arith.constant 0 : index
    %10 = vector.load %arg5[%c0_4, %c0_5] : memref<8x512xf32, #tpu.memory_space<vmem>>, vector<8x512xf32>
    %11 = vector.shape_cast %9 : vector<8x512xf32> to vector<1x8x512xf32>
    %cst_6 = arith.constant dense<0.000000e+00> : vector<8x512xf32>
    %12 = vector.multi_reduction <add>, %11, %cst_6 [0] : vector<1x8x512xf32> to vector<8x512xf32>
    %13 = arith.addf %10, %12 : vector<8x512xf32>
    %c0_7 = arith.constant 0 : index
    %c0_8 = arith.constant 0 : index
    %14 = vector.load %arg5[%c0_7, %c0_8] : memref<8x512xf32, #tpu.memory_space<vmem>>, vector<8x512xf32>
    tpu.vector_store %arg5[%c0_7, %c0_8], %13 {strides = array<i32>} : memref<8x512xf32, #tpu.memory_space<vmem>>, vector<8x512xf32>,
    %c0_i32_9 = arith.constant 0 : i32
    %15 = arith.cmpi eq, %arg1, %c0_i32_9 : i32
    %16 = arith.extui %15 : i1 to i32
    %c0_i32_10 = arith.constant 0 : i32
    %17 = arith.cmpi ne, %16, %c0_i32_10 : i32
    scf.if %17 {
      %c0_11 = arith.constant 0 : index
      %c0_12 = arith.constant 0 : index
      %18 = vector.load %arg5[%c0_11, %c0_12] : memref<8x512xf32, #tpu.memory_space<vmem>>, vector<8x512xf32>
      %c0_13 = arith.constant 0 : index
      %c0_14 = arith.constant 0 : index
      %c0_15 = arith.constant 0 : index
      %19 = vector.load %arg4[%c0_13, %c0_14, %c0_15] : memref<1x8x512xf32, #tpu.memory_space<vmem>>, vector<1x8x512xf32>
      %20 = vector.shape_cast %19 : vector<1x8x512xf32> to vector<8x512xf32>
      %21 = vector.shape_cast %18 : vector<8x512xf32> to vector<1x8x512xf32>
      tpu.vector_store %arg4[%c0_13, %c0_14, %c0_15], %21 {strides = array<i32>} : memref<1x8x512xf32, #tpu.memory_space<vmem>>, vector<1x8x512xf32>,
    } else {
    }
    return
  }
  func.func @transform_0(%arg0: i32, %arg1: i32) -> (i32, i32) {
    %c1_i32 = arith.constant 1 : i32
    %0 = arith.muli %arg0, %c1_i32 : i32
    %1 = arith.addi %0, %arg1 : i32
    %c0_i32 = arith.constant 0 : i32
    %c0_i32_0 = arith.constant 0 : i32
    return %1, %c0_i32 : i32, i32
  }
  func.func @transform_1(%arg0: i32, %arg1: i32) -> (i32, i32) {
    %c1_i32 = arith.constant 1 : i32
    %0 = arith.muli %arg0, %c1_i32 : i32
    %1 = arith.addi %0, %arg1 : i32
    %c0_i32 = arith.constant 0 : i32
    %c0_i32_0 = arith.constant 0 : i32
    return %1, %c0_i32 : i32, i32
  }
  func.func @transform_2(%arg0: i32, %arg1: i32) -> (i32, i32, i32) {
    %c0_i32 = arith.constant 0 : i32
    %c0_i32_0 = arith.constant 0 : i32
    %c0_i32_1 = arith.constant 0 : i32
    return %arg0, %c0_i32, %c0_i32_0 : i32, i32, i32
  }
}

</mosaic_0001>

<llo_original>
// kernel: tpu_custom_call.1
$region0: #{tpu_custom_call.1}
  #allocation0 [shape = 'u32[]', space=smem, size = 0x4, offset = 0x4, fixed_abs, tag = 'smem constant byte address 0x4 - core index']
  #allocation1 [shape = 'u32[72,128]{1,0:T(1,128)}', space=vmem, size = 0x9000, scoped, tag = 'internal scratch']
  #allocation2 [shape = 'f32[8,512]{1,0:T(8,128)}', space=vmem, size = 0x4000, scoped, tag = 'scratch operand']
  %s0 = inlined_call_operand.hbm [shape: f32[16,512], index: 0, kind: input, shape index: {}]
  %s1 = inlined_call_operand.hbm [shape: f32[16,512], index: 1, kind: input, shape index: {}]
  %s2 = inlined_call_operand.hbm [shape: f32[2,8,512], index: 2, kind: output, shape index: {}]
  %s3 = sld [smem:[#allocation0]]
  $region57: #{tpu_custom_call.1} parent=0
    _
  %s5 = ssub.s32 1, %s3
  %s6 = scalar_select 0, %s5, %s3
  $region1: #{tpu_custom_call.1} parent=0
    #allocation3 [shape = 'u8[32768]{0}', space=vmem, size = 0x8000, scoped, tag = 'input window, operand 0']
    #allocation4 [shape = 's32[2]{0}', space=sflag, size = 0x8, scoped, tag = 'scoped memory for tpu_custom_call.1']
    #allocation5 [shape = 's32[2]{0}', space=sflag, size = 0x8, scoped, tag = 'scoped memory for tpu_custom_call.1']
    #allocation6 [shape = 'u8[32768]{0}', space=vmem, size = 0x8000, scoped, tag = 'input window, operand 1']
    #allocation7 [shape = 's32[2]{0}', space=sflag, size = 0x8, scoped, tag = 'scoped memory for tpu_custom_call.1']
    #allocation8 [shape = 'u8[32768]{0}', space=vmem, size = 0x8000, scoped, tag = 'output window, operand 0']
    %7 = vsyncpa [#allocation4], 0
    %s8 = scalar_lea.sflag [#allocation4], 1
    %9 = vsyncpa %s8, 0
    %10 = vsyncpa [#allocation7], 0
    %s11 = scalar_lea.sflag [#allocation7], 1
    %12 = vsyncpa %s11, 0
    %13 = vsyncpa [#allocation5], 0
    %s14 = scalar_lea.sflag [#allocation5], 1
    %15 = vsyncpa %s14, 0
    loop: start=0, step=1, limit=4
    $region2: #{tpu_custom_call.1} parent=1 // loop_pre_header
      _
    $region3: #{tpu_custom_call.1} parent=1 // loop_header
      %s17 = sphi 0, %s21
      %p18 = scmp.ge.s32.totalorder %s17, 4
      %s24 = sphi 0, %s36
      %s25 = sphi 0, %s32
      %s26 = sphi 0, %s24
      %s27 = sphi 0, %s25
      %s28 = sphi 0, %s26
      %s29 = sphi 0, %s27
      %s41 = sphi 0, %s43
      %s44 = sphi 0, %s41
      %s45 = sphi 0, %s44
      %s61 = sphi 0, %s45
      %s69 = sphi 0, %s71
      %s72 = sphi 0, %s69
      %s73 = sphi 0, %s72
      %s89 = sphi 0, %s73
      %s95 = sphi 0, %s97
      %s98 = sphi 0, %s95
      %s99 = sphi 0, %s98
      %s115 = sphi 0, %s99
    $region4: #{tpu_custom_call.1} parent=1 // loop_header_branch
      %20 = sbr.rel (%p18) target = $region8
    $region5: #{tpu_custom_call.1} parent=1 // loop_body
      %s22 = ssub.s32 %s17, 1
      %s23 = ssub.s32 %s17, 2
      %s30 = sadd.s32 1, %s25
      %p31 = scmp.ge.s32.totalorder %s30, 1
      %s32 = scalar_select %p31, 0, %s30
      %s33 = sadd.s32 1, %s24
      %s34 = scalar_select %p31, %s33, %s24
      %p35 = scmp.ge.s32.totalorder %s34, 2
      %s36 = scalar_select %p35, 0, %s34
      %s37 = sadd.s32 %s24, %s25
      %s38 = sadd.s32 %s36, %s32
      %s39 = ssub.s32 %s37, %s38
      %p40 = scmp.eq.s32.totalorder %s39, 0
      %s42 = sadd.s32 %s41, 1
      %s43 = scalar_select %p40, %s41, %s42
      %p46 = pneg %p40
      %p47 = scmp.eq.s32.totalorder %s17, 1
      %p48 = por %p46, %p47
      %p49 = scmp.ne.s32.totalorder %s41, %s44
      %p50 = scmp.eq.s32.totalorder %s17, 0
      %p51 = por %p49, %p50
      %p52 = scmp.ne.s32.totalorder %s41, %s44
      %p53 = scmp.eq.s32.totalorder %s22, 1
      %p54 = por %p52, %p53
      %p55 = scmp.ne.s32.totalorder %s44, %s45
      %p56 = scmp.eq.s32.totalorder %s22, 0
      %p57 = por %p55, %p56
      %p58 = scmp.ne.s32.totalorder %s44, %s45
      %p59 = scmp.eq.s32.totalorder %s23, 1
      %p60 = por %p58, %p59
      %p62 = scmp.ne.s32.totalorder %s45, %s61
      %p63 = scmp.eq.s32.totalorder %s23, 0
      %p64 = por %p62, %p63
      %s65 = sadd.s32 %s24, %s25
      %s66 = sadd.s32 %s36, %s32
      %s67 = ssub.s32 %s65, %s66
      %p68 = scmp.eq.s32.totalorder %s67, 0
      %s70 = sadd.s32 %s69, 1
      %s71 = scalar_select %p68, %s69, %s70
      %p74 = pneg %p68
      %p75 = scmp.eq.s32.totalorder %s17, 1
      %p76 = por %p74, %p75
      %p77 = scmp.ne.s32.totalorder %s69, %s72
      %p78 = scmp.eq.s32.totalorder %s17, 0
      %p79 = por %p77, %p78
      %p80 = scmp.ne.s32.totalorder %s69, %s72
      %p81 = scmp.eq.s32.totalorder %s22, 1
      %p82 = por %p80, %p81
      %p83 = scmp.ne.s32.totalorder %s72, %s73
      %p84 = scmp.eq.s32.totalorder %s22, 0
      %p85 = por %p83, %p84
      %p86 = scmp.ne.s32.totalorder %s72, %s73
      %p87 = scmp.eq.s32.totalorder %s23, 1
      %p88 = por %p86, %p87
      %p90 = scmp.ne.s32.totalorder %s73, %s89
      %p91 = scmp.eq.s32.totalorder %s23, 0
      %p92 = por %p90, %p91
      %s93 = ssub.s32 %s24, %s36
      %p94 = scmp.eq.s32.totalorder %s93, 0
      %s96 = sadd.s32 %s95, 1
      %s97 = scalar_select %p94, %s95, %s96
      %p100 = pneg %p94
      %p101 = scmp.eq.s32.totalorder %s17, 1
      %p102 = por %p100, %p101
      %p103 = scmp.ne.s32.totalorder %s95, %s98
      %p104 = scmp.eq.s32.totalorder %s17, 0
      %p105 = por %p103, %p104
      %p106 = scmp.ne.s32.totalorder %s95, %s98
      %p107 = scmp.eq.s32.totalorder %s22, 1
      %p108 = por %p106, %p107
      %p109 = scmp.ne.s32.totalorder %s98, %s99
      %p110 = scmp.eq.s32.totalorder %s22, 0
      %p111 = por %p109, %p110
      %p112 = scmp.ne.s32.totalorder %s98, %s99
      %p113 = scmp.eq.s32.totalorder %s23, 1
      %p114 = por %p112, %p113
      %p116 = scmp.ne.s32.totalorder %s99, %s115
      %p117 = scmp.eq.s32.totalorder %s23, 0
      %p118 = por %p116, %p117
      %p119 = scmp.le.s32.totalorder 1, %s17
      %p120 = scmp.lt.s32.totalorder %s17, 3
      %p121 = pnand %p119, %p120
      %p122 = pneg %p121
      // Predicated region
      $region9: #{tpu_custom_call.1} parent=5 // pred_check
        _
      $region10: #{tpu_custom_call.1} parent=5 // pred_check_branch
        %124 = sbr.rel (%p121) target = $region12
      $region11: #{tpu_custom_call.1} parent=5 // pred_region
        %s125 = ssub.s32 %s17, 1
      $region12: #{tpu_custom_call.1} parent=5 // pred_fallthru
        _
      %p126 = scmp.lt.s32.totalorder %s17, 2
      // Predicated region
      $region13: #{tpu_custom_call.1} parent=5 // pred_check
        %p127 = pneg %p126
      $region14: #{tpu_custom_call.1} parent=5 // pred_check_branch
        %129 = sbr.rel (%p127) target = $region16
      $region15: #{tpu_custom_call.1} parent=5 // pred_region
        // Predicated region
        $region17: #{tpu_custom_call.1} parent=15 // pred_check
          %p130 = pneg %p51
        $region18: #{tpu_custom_call.1} parent=15 // pred_check_branch
          %132 = sbr.rel (%p130) target = $region20
        $region19: #{tpu_custom_call.1} parent=15 // pred_region
          %s133 = sand.u32 %s41, 1
          %s134 = scalar_lea.sflag [#allocation4], %s133
          %s135 = sand.u32 %s41, 1
          %s136 = smul.addr %s135, 32
          %s137 = scalar_lea.vmem [#allocation3], %s136
          %s138 = sadd.s32 %s24, %s25
          %140 = vsyncadd %s134, 0
          %s141 = smul.addr %s138, 4
          %s142 = smul.addr %s141, 8
          %s143 = scalar_lea.hbm %s0, %s142
          %s145 = sshll.u32 %s143, 4
          %s146 = int_to_ptr.hbm [resolvable:$true] %s145
          %s147 = sshll.u32 %s137, 4
          %s148 = int_to_ptr.vmem [resolvable:$true] %s147
          %150 = dma.hbm_to_vmem [thread:$0]  %s146, 512, %s148, %s134
        $region20: #{tpu_custom_call.1} parent=15 // pred_fallthru
          _
        // Predicated region
        $region21: #{tpu_custom_call.1} parent=15 // pred_check
          %p151 = pneg %p79
        $region22: #{tpu_custom_call.1} parent=15 // pred_check_branch
          %153 = sbr.rel (%p151) target = $region24
        $region23: #{tpu_custom_call.1} parent=15 // pred_region
          %s154 = sand.u32 %s69, 1
          %s155 = scalar_lea.sflag [#allocation7], %s154
          %s156 = sand.u32 %s69, 1
          %s157 = smul.addr %s156, 32
          %s158 = scalar_lea.vmem [#allocation6], %s157
          %s159 = sadd.s32 %s24, %s25
          %161 = vsyncadd %s155, 0
          %s162 = smul.addr %s159, 4
          %s163 = smul.addr %s162, 8
          %s164 = scalar_lea.hbm %s1, %s163
          %s166 = sshll.u32 %s164, 4
          %s167 = int_to_ptr.hbm [resolvable:$true] %s166
          %s168 = sshll.u32 %s158, 4
          %s169 = int_to_ptr.vmem [resolvable:$true] %s168
          %171 = dma.hbm_to_vmem [thread:$0]  %s167, 512, %s169, %s155
        $region24: #{tpu_custom_call.1} parent=15 // pred_fallthru
          _
      $region16: #{tpu_custom_call.1} parent=5 // pred_fallthru
        _
      %p172 = scmp.le.s32.totalorder 1, %s17
      %p173 = scmp.lt.s32.totalorder %s17, 3
      %p174 = pnand %p172, %p173
      %p175 = pneg %p174
      // Predicated region
      $region25: #{tpu_custom_call.1} parent=5 // pred_check
        _
      $region26: #{tpu_custom_call.1} parent=5 // pred_check_branch
        %177 = sbr.rel (%p174) target = $region28
      $region27: #{tpu_custom_call.1} parent=5 // pred_region
        %s178 = ssub.s32 %s17, 1
        %s179 = sand.u32 %s44, 1
        %s180 = scalar_lea.sflag [#allocation4], %s179
        %s181 = sand.u32 %s44, 1
        %s182 = smul.addr %s181, 32
        %s183 = scalar_lea.vmem [#allocation3], %s182
        // Predicated region
        $region29: #{tpu_custom_call.1} parent=27 // pred_check
          %p184 = pneg %p57
        $region30: #{tpu_custom_call.1} parent=27 // pred_check_branch
          %186 = sbr.rel (%p184) target = $region32
        $region31: #{tpu_custom_call.1} parent=27 // pred_region
          %188 = dma.done %s180, 512
        $region32: #{tpu_custom_call.1} parent=27 // pred_fallthru
          _
        %s189 = sand.u32 %s72, 1
        %s190 = scalar_lea.sflag [#allocation7], %s189
        %s191 = sand.u32 %s72, 1
        %s192 = smul.addr %s191, 32
        %s193 = scalar_lea.vmem [#allocation6], %s192
        // Predicated region
        $region33: #{tpu_custom_call.1} parent=27 // pred_check
          %p194 = pneg %p85
        $region34: #{tpu_custom_call.1} parent=27 // pred_check_branch
          %196 = sbr.rel (%p194) target = $region36
        $region35: #{tpu_custom_call.1} parent=27 // pred_region
          %198 = dma.done %s190, 512
        $region36: #{tpu_custom_call.1} parent=27 // pred_fallthru
          _
        %s199 = sand.u32 %s44, 1
        %s200 = scalar_lea.sflag [#allocation4], %s199
        %s201 = sand.u32 %s44, 1
        %s202 = smul.addr %s201, 32
        %s203 = scalar_lea.vmem [#allocation3], %s202
        %p204 = pneg %p57
        %p205 = pneg %p54
        %s206 = sand.u32 %s72, 1
        %s207 = scalar_lea.sflag [#allocation7], %s206
        %s208 = sand.u32 %s72, 1
        %s209 = smul.addr %s208, 32
        %s210 = scalar_lea.vmem [#allocation6], %s209
        %p211 = pneg %p85
        %p212 = pneg %p82
        %p213 = pneg %p111
        %p214 = pneg %p108
        %s215 = sand.u32 %s98, 1
        %s216 = scalar_lea.sflag [#allocation5], %s215
        %s217 = sand.u32 %s98, 1
        %s218 = smul.addr %s217, 32
        %s219 = scalar_lea.vmem [#allocation8], %s218
        %s220 = sadd.s32 %s26, %s27
        %s221 = sadd.s32 %s26, %s27
        %p222 = scmp.eq.s32.totalorder %s27, 0
        // Predicated region
        $region37: #{tpu_custom_call.1} parent=27 // pred_check
          %p223 = pneg %p222
        $region38: #{tpu_custom_call.1} parent=27 // pred_check_branch
          %225 = sbr.rel (%p223) target = $region40
        $region39: #{tpu_custom_call.1} parent=27 // pred_region
          %226 = vst [vmem:[#allocation2] sm:$0xff] 0.0
          %227 = vst [vmem:[#allocation2 + $0x8] sm:$0xff] 0.0
          %228 = vst [vmem:[#allocation2 + $0x10] sm:$0xff] 0.0
          %229 = vst [vmem:[#allocation2 + $0x18] sm:$0xff] 0.0
        $region40: #{tpu_custom_call.1} parent=27 // pred_fallthru
          _
        %v230 = vld [vmem:[%s183] sm:$0xff]
        %v231 = vld [vmem:[%s183 + $0x8] sm:$0xff]
        %v232 = vld [vmem:[%s183 + $0x10] sm:$0xff]
        %v233 = vld [vmem:[%s183 + $0x18] sm:$0xff]
        %v234 = vld [vmem:[%s193] sm:$0xff]
        %v235 = vld [vmem:[%s193 + $0x8] sm:$0xff]
        %v236 = vld [vmem:[%s193 + $0x10] sm:$0xff]
        %v237 = vld [vmem:[%s193 + $0x18] sm:$0xff]
        %v238 = vsub.f32 %v230, %v234
        %v239 = vsub.f32 %v231, %v235
        %v240 = vsub.f32 %v232, %v236
        %v241 = vsub.f32 %v233, %v237
        %v242 = vmul.f32 %v238, %v238
        %v243 = vmul.f32 %v239, %v239
        %v244 = vmul.f32 %v240, %v240
        %v245 = vmul.f32 %v241, %v241
        %v246 = vsub.f32 1.005, %v234
        %v247 = vsub.f32 1.005, %v235
        %v248 = vsub.f32 1.005, %v236
        %v249 = vsub.f32 1.005, %v237
        %v250 = vrcp.pop %v246
        %v251 = vmul.f32 %v246, %v250
        %v252 = vsub.f32 1.0, %v251
        %v253 = vmul.f32 %v250, %v252
        %v254 = vadd.f32 %v250, %v253
        %vm255 = vweird.f32 %v246
        %vm256 = vweird.f32 %v250
        %vm257 = vmor %vm255, %vm256
        %v258 = vsel %vm257, %v250, %v254
        %v259 = vand.u32 2147483647, %v246
        %vm260 = vcmp.eq.f32.partialorder %v259, 8.507059e+37
        %v261 = vand.u32 %v246, 2147483648
        %v262 = vor.u32 1.1754944e-38, %v261
        %v263 = vsel %vm260, %v262, %v258
        %v264 = vmul.f32 %v242, %v263
        %v265 = vrcp.pop %v247
        %v266 = vmul.f32 %v247, %v265
        %v267 = vsub.f32 1.0, %v266
        %v268 = vmul.f32 %v265, %v267
        %v269 = vadd.f32 %v265, %v268
        %vm270 = vweird.f32 %v247
        %vm271 = vweird.f32 %v265
        %vm272 = vmor %vm270, %vm271
        %v273 = vsel %vm272, %v265, %v269
        %v274 = vand.u32 2147483647, %v247
        %vm275 = vcmp.eq.f32.partialorder %v274, 8.507059e+37
        %v276 = vand.u32 %v247, 2147483648
        %v277 = vor.u32 1.1754944e-38, %v276
        %v278 = vsel %vm275, %v277, %v273
        %v279 = vmul.f32 %v243, %v278
        %v280 = vrcp.pop %v248
        %v281 = vmul.f32 %v248, %v280
        %v282 = vsub.f32 1.0, %v281
        %v283 = vmul.f32 %v280, %v282
        %v284 = vadd.f32 %v280, %v283
        %vm285 = vweird.f32 %v248
        %vm286 = vweird.f32 %v280
        %vm287 = vmor %vm285, %vm286
        %v288 = vsel %vm287, %v280, %v284
        %v289 = vand.u32 2147483647, %v248
        %vm290 = vcmp.eq.f32.partialorder %v289, 8.507059e+37
        %v291 = vand.u32 %v248, 2147483648
        %v292 = vor.u32 1.1754944e-38, %v291
        %v293 = vsel %vm290, %v292, %v288
        %v294 = vmul.f32 %v244, %v293
        %v295 = vrcp.pop %v249
        %v296 = vmul.f32 %v249, %v295
        %v297 = vsub.f32 1.0, %v296
        %v298 = vmul.f32 %v295, %v297
        %v299 = vadd.f32 %v295, %v298
        %vm300 = vweird.f32 %v249
        %vm301 = vweird.f32 %v295
        %vm302 = vmor %vm300, %vm301
        %v303 = vsel %vm302, %v295, %v299
        %v304 = vand.u32 2147483647, %v249
        %vm305 = vcmp.eq.f32.partialorder %v304, 8.507059e+37
        %v306 = vand.u32 %v249, 2147483648
        %v307 = vor.u32 1.1754944e-38, %v306
        %v308 = vsel %vm305, %v307, %v303
        %v309 = vmul.f32 %v245, %v308
        %v310 = vld [vmem:[#allocation2] sm:$0xff]
        %v311 = vld [vmem:[#allocation2 + $0x8] sm:$0xff]
        %v312 = vld [vmem:[#allocation2 + $0x10] sm:$0xff]
        %v313 = vld [vmem:[#allocation2 + $0x18] sm:$0xff]
        %v314 = vadd.f32 %v264, 0.0
        %v315 = vadd.f32 %v279, 0.0
        %v316 = vadd.f32 %v294, 0.0
        %v317 = vadd.f32 %v309, 0.0
        %v318 = vadd.f32 %v310, %v314
        %v319 = vadd.f32 %v311, %v315
        %v320 = vadd.f32 %v312, %v316
        %v321 = vadd.f32 %v313, %v317
        %322 = vst [vmem:[#allocation2] sm:$0xff] %v318
        %323 = vst [vmem:[#allocation2 + $0x8] sm:$0xff] %v319
        %324 = vst [vmem:[#allocation2 + $0x10] sm:$0xff] %v320
        %325 = vst [vmem:[#allocation2 + $0x18] sm:$0xff] %v321
        // Predicated region
        $region41: #{tpu_custom_call.1} parent=27 // pred_check
          %p326 = pneg %p222
        $region42: #{tpu_custom_call.1} parent=27 // pred_check_branch
          %328 = sbr.rel (%p326) target = $region44
        $region43: #{tpu_custom_call.1} parent=27 // pred_region
          %v329 = vld [vmem:[#allocation2] sm:$0xff]
          %v330 = vld [vmem:[#allocation2 + $0x8] sm:$0xff]
          %v331 = vld [vmem:[#allocation2 + $0x10] sm:$0xff]
          %v332 = vld [vmem:[#allocation2 + $0x18] sm:$0xff]
          %333 = vst [vmem:[%s219] sm:$0xff] %v329
          %334 = vst [vmem:[%s219 + $0x8] sm:$0xff] %v330
          %335 = vst [vmem:[%s219 + $0x10] sm:$0xff] %v331
          %336 = vst [vmem:[%s219 + $0x18] sm:$0xff] %v332
        $region44: #{tpu_custom_call.1} parent=27 // pred_fallthru
          _
        %s337 = sand.u32 %s98, 1
        %s338 = scalar_lea.sflag [#allocation5], %s337
        %s339 = sand.u32 %s98, 1
        %s340 = smul.addr %s339, 32
        %s341 = scalar_lea.vmem [#allocation8], %s340
        // Predicated region
        $region45: #{tpu_custom_call.1} parent=27 // pred_check
          %p342 = pneg %p108
        $region46: #{tpu_custom_call.1} parent=27 // pred_check_branch
          %344 = sbr.rel (%p342) target = $region48
        $region47: #{tpu_custom_call.1} parent=27 // pred_region
          %346 = vsyncadd %s338, 0
          %s347 = smul.addr %s26, 4
          %s348 = smul.addr %s347, 8
          %s349 = scalar_lea.hbm %s2, %s348
          %s351 = sshll.u32 %s341, 4
          %s352 = int_to_ptr.vmem [resolvable:$true] %s351
          %s353 = sshll.u32 %s349, 4
          %s354 = int_to_ptr.hbm [resolvable:$true] %s353
          %356 = dma.vmem_to_hbm [thread:$0]  %s352, 512, %s354, %s338
        $region48: #{tpu_custom_call.1} parent=27 // pred_fallthru
          _
      $region28: #{tpu_custom_call.1} parent=5 // pred_fallthru
        _
      %p357 = scmp.le.s32.totalorder 2, %s17
      // Predicated region
      $region49: #{tpu_custom_call.1} parent=5 // pred_check
        %p358 = pneg %p357
      $region50: #{tpu_custom_call.1} parent=5 // pred_check_branch
        %360 = sbr.rel (%p358) target = $region52
      $region51: #{tpu_custom_call.1} parent=5 // pred_region
        %s361 = ssub.s32 %s17, 2
        // Predicated region
        $region53: #{tpu_custom_call.1} parent=51 // pred_check
          %p362 = pneg %p114
        $region54: #{tpu_custom_call.1} parent=51 // pred_check_branch
          %364 = sbr.rel (%p362) target = $region56
        $region55: #{tpu_custom_call.1} parent=51 // pred_region
          %s365 = sand.u32 %s99, 1
          %s366 = scalar_lea.sflag [#allocation5], %s365
          %s367 = sand.u32 %s99, 1
          %s368 = smul.addr %s367, 32
          %s369 = scalar_lea.vmem [#allocation8], %s368
          %371 = dma.done %s366, 512
        $region56: #{tpu_custom_call.1} parent=51 // pred_fallthru
          _
      $region52: #{tpu_custom_call.1} parent=5 // pred_fallthru
        _
    $region6: #{tpu_custom_call.1} parent=1 // loop_footer
      %s21 = sadd.s32 1, %s17
    $region7: #{tpu_custom_call.1} parent=1 // loop_footer_branch
      %16 = sbr.rel target = $region3
    $region8: #{tpu_custom_call.1} parent=1 // loop_exit
      _
    %372 = vsyncpa [#allocation4], 1
    %s373 = scalar_lea.sflag [#allocation4], 1
    %374 = vsyncpa %s373, 1
    %375 = vsyncpa [#allocation7], 1
    %s376 = scalar_lea.sflag [#allocation7], 1
    %377 = vsyncpa %s376, 1
    %378 = vsyncpa [#allocation5], 1
    %s379 = scalar_lea.sflag [#allocation5], 1
    %380 = vsyncpa %s379, 1

</llo_original>
